<compile_context>
chip_gen: v7x
topology: tpu7x:2x2x1
jax: 0.10.0
libtpu: 0.0.40
codegen_flags: <defaults>
</compile_context>

<pallas_src>
import functools

import jax
import jax.numpy as jnp
import numpy as np
from jax.experimental import pallas as pl
from jax.experimental.pallas import tpu as pltpu


# ----------------------------- Pallas kernel --------------------------------

def convmm_stats_kernel(a_ref, b_ref, conv_ref, stats_ref):
    """One (row, lane) tile of C = A @ B.

    bf16 inputs, f32 MXU accumulation; the conv tile is stored as bf16 and the
    per-tile per-column sum / sum-of-squares partials (from the f32 accumulator)
    are stored as two direct row writes (no concatenate relayout).
    """
    c = jnp.dot(a_ref[...], b_ref[...], preferred_element_type=jnp.float32)
    conv_ref[...] = c.astype(conv_ref.dtype)
    stats_ref[0, 0:1, :] = jnp.sum(c, axis=0, keepdims=True)
    stats_ref[0, 1:2, :] = jnp.sum(c * c, axis=0, keepdims=True)


# ------------------------------- JAX glue ------------------------------------

def _round_up(a, b):
    return (a + b - 1) // b * b


def _subpixel_im2col(x, w, kp, cop, mp):
    """Sub-pixel lowering of ConvTranspose2d(k=4, s=2, p=1, bias=False).

    Builds, directly in bf16 and already zero-padded:
      A [mp, kp]   : 3x3 union patches of the 1-padded input (rows = N*H*W base pixels)
      B [kp, cop]  : rearranged weights, columns ordered (co, ph, pw)
    such that (A @ B)[n*H*W + mh*W + mw, co*4 + ph*2 + pw]
              == ConvTranspose2d(x, w)[n, co, 2*mh + ph, 2*mw + pw].
    """
    N, Ci, H, W = x.shape
    _, Co, K, _ = w.shape
    M = N * H * W
    Kdim = Ci * 9
    Csub = Co * 4

    xp = jnp.pad(x.astype(jnp.bfloat16), ((0, 0), (0, 0), (1, 1), (1, 1)))
    cols = [xp[:, :, uh:uh + H, uw:uw + W] for uh in range(3) for uw in range(3)]
    patches = jnp.stack(cols, axis=2)                       # [N, Ci, 9, H, W] bf16
    A = patches.transpose(0, 3, 4, 1, 2).reshape(M, Kdim)
    A = jnp.pad(A, ((0, mp - M), (0, kp - Kdim)))           # padded rows/cols are zero

    # Weight rearrangement: phase (ph, pw) at base position m uses padded-input
    # taps (m+ph+dh, m+pw+dw), dh/dw in {0,1}, with kernel taps kh = 3-ph-2*dh.
    B = jnp.zeros((Ci, 3, 3, Co, 2, 2), w.dtype)
    for ph in range(2):
        for pw in range(2):
            for dh in range(2):
                for dw in range(2):
                    kh = 3 - ph - 2 * dh
                    kw = 3 - pw - 2 * dw
                    B = B.at[:, ph + dh, pw + dw, :, ph, pw].set(w[:, :, kh, kw])
    B = B.reshape(Kdim, Csub)
    B = jnp.pad(B, ((0, kp - Kdim), (0, cop - Csub))).astype(jnp.bfloat16)
    return A, B


def g_block_forward(x, w, gamma, beta, *, stride=2, padding=1, tm=1024, eps=1e-5):
    """Forward pass of G_block. Returns NCHW float32 output."""
    N, Ci, H, W = x.shape
    _, Co, K, _ = w.shape
    assert (K, stride, padding) == (4, 2, 1), (
        "sub-pixel lowering specialized to G_block defaults k=4, s=2, p=1")
    # TODO(synk): other (k, s, p) configs would need a generic (zero-dilated) fallback.

    s = stride
    sp2 = s * s
    Ho, Wo = H * s, W * s
    M = N * H * W
    Csub = Co * sp2                         # sub-channels, column order (co, ph, pw)
    Cop = _round_up(Csub, 128)              # lane-dense output width
    Kdim = Ci * 9
    Kp = _round_up(Kdim, 16)                # bf16 sublane-friendly contraction dim

    # Output-lane tile (v7x: keeps double buffering alive and shards lanes for big Co).
    if Cop <= 512:
        tn_c = Cop
    else:
        tn_c = max(t for t in (512, 256, 128) if Cop % t == 0)

    # Row tile: big by default; >= 2 tiles when possible (v7x dual-TC); bounded working set.
    tm_eff = min(tm, _round_up(M, 8))
    if M > 8:
        tm_eff = min(tm_eff, _round_up(-(-M // 2), 8))

    def _vmem_bytes(t):  # double-buffered bf16 A/B/C tiles + f32 stats
        return 2 * 2 * (t * Kp + Kp * tn_c + t * tn_c) + 2 * 4 * 2 * tn_c

    while tm_eff > 256 and _vmem_bytes(tm_eff) > 40 * 1024 * 1024:
        tm_eff = _round_up(tm_eff // 2, 8)

    Mp = _round_up(M, tm_eff)
    n_m = Mp // tm_eff
    n_c = Cop // tn_c

    A, B = _subpixel_im2col(x, w, Kp, Cop, Mp)

    conv_out, part_stats = pl.pallas_call(
        convmm_stats_kernel,
        out_shape=(
            jax.ShapeDtypeStruct((Mp, Cop), jnp.bfloat16),      # bf16 intermediate
            jax.ShapeDtypeStruct((n_m, 2, Cop), jnp.float32),   # per-tile partial stats
        ),
        grid=(n_m, n_c),                                        # lane axis innermost
        in_specs=[
            pl.BlockSpec((tm_eff, Kp), lambda i, j: (i, 0)),
            pl.BlockSpec((Kp, tn_c), lambda i, j: (0, j)),
        ],
        out_specs=(
            pl.BlockSpec((tm_eff, tn_c), lambda i, j: (i, j)),
            pl.BlockSpec((1, 2, tn_c), lambda i, j: (i, 0, j)),
        ),
        compiler_params=pltpu.CompilerParams(
            dimension_semantics=("parallel", "parallel"),
            vmem_limit_bytes=64 * 1024 * 1024),
    )(A, B)

    # ---- tiny glue reduction: Chan-style combine of per-tile (count, sum, sumsq) ----
    # Padded A rows are zero, so they contribute 0 to sum/sumsq; true per-tile counts
    # are used, keeping batch statistics exact.
    counts = jnp.full((n_m,), float(tm_eff), jnp.float32)
    counts = counts.at[-1].set(float(M - (n_m - 1) * tm_eff))
    sums = part_stats[:, 0, :Csub].reshape(n_m, Co, sp2)
    sqs = part_stats[:, 1, :Csub].reshape(n_m, Co, sp2)
    sums_g = sums.transpose(0, 2, 1).reshape(n_m * sp2, Co)     # groups = (tile, phase)
    sqs_g = sqs.transpose(0, 2, 1).reshape(n_m * sp2, Co)
    cnt_g = jnp.repeat(counts, sp2)[:, None]                    # [groups, 1]
    total = jnp.float32(M * sp2)                                # = N * Ho * Wo
    mean_g = sums_g / cnt_g
    m2_g = jnp.maximum(sqs_g - sums_g * mean_g, 0.0)            # per-tile M2 (small-count only)
    mean = jnp.sum(sums_g, axis=0) / total                      # [Co]
    m2 = jnp.sum(m2_g, axis=0) + jnp.sum(cnt_g * (mean_g - mean[None, :]) ** 2, axis=0)
    var = m2 / total                                            # biased, as PyTorch BN normalizes
    scale_c = gamma * jax.lax.rsqrt(var + eps)
    shift_c = beta - mean * scale_c

    # ---- fused BN FMA + ReLU + pixel shuffle: one XLA pass over the bf16 activation ----
    scale = jnp.repeat(scale_c, sp2)[None, :]
    shift = jnp.repeat(shift_c, sp2)[None, :]
    y = jnp.maximum(conv_out[:M, :Csub].astype(jnp.float32) * scale + shift, 0.0)
    y = y.reshape(N, H, W, Co, s, s).transpose(0, 3, 1, 4, 2, 5).reshape(N, Co, Ho, Wo)
    return y


# ------------------------------ reference -----------------------------------

def g_block_reference(x, w, gamma, beta, *, stride=2, padding=1, eps=1e-5):
    Ci, Co, K, _ = w.shape
    wt = jnp.transpose(w[:, :, ::-1, ::-1], (1, 0, 2, 3))      # [Co, Ci, K, K]
    conv = jax.lax.conv_general_dilated(
        x, wt, window_strides=(1, 1),
        padding=[(K - 1 - padding,) * 2] * 2,
        lhs_dilation=(stride, stride),
        dimension_numbers=("NCHW", "OIHW", "NCHW"),
    )
    mean = conv.mean(axis=(0, 2, 3), keepdims=True)
    var = conv.var(axis=(0, 2, 3), keepdims=True)               # biased, like PyTorch BN
    g = gamma.reshape(1, Co, 1, 1)
    b = beta.reshape(1, Co, 1, 1)
    return jnp.maximum((conv - mean) * jax.lax.rsqrt(var + eps) * g + b, 0.0)


# --------------------------------- main --------------------------------------

if __name__ == "__main__":
    key = jax.random.PRNGKey(0)
    k1, k2 = jax.random.split(key)

    # G_block(out_channels=8) defaults: in_channels=3, kernel=4, stride=2, pad=1
    N, Ci, H, W = 2, 3, 8, 8
    Co, K, s, p = 8, 4, 2, 1

    x = jax.random.normal(k1, (N, Ci, H, W), dtype=jnp.float32)
    weight = jax.random.normal(k2, (Ci, Co, K, K), dtype=jnp.float32) * 0.1
    gamma = jnp.ones((Co,), jnp.float32)    # PyTorch BatchNorm2d default init
    beta = jnp.zeros((Co,), jnp.float32)
    # TODO(synk): BatchNorm running_mean/running_var updates (training-mode buffer side
    # effect) are not materialized; the forward uses batch statistics as PyTorch .train() does.

    fwd = jax.jit(functools.partial(g_block_forward, stride=s, padding=p))
    out = jax.block_until_ready(fwd(x, weight, gamma, beta))

    ref = g_block_reference(x, weight, gamma, beta, stride=s, padding=p)
    # bf16 matmul inputs + bf16 conv intermediate (f32 accumulation / normalization)
    # -> loosen tolerance vs. the f32 reference.
    np.testing.assert_allclose(np.asarray(out), np.asarray(ref), rtol=5e-2, atol=5e-2)
    assert out.shape == (N, Co, s * H, s * W)

    print("KERNEL_OK")
</pallas_src>

<mosaic_0001>
module attributes {stable_mosaic.version = 11 : i64} {
  func.func @convmm_stats_kernel(%arg0: i32, %arg1: i32, %arg2: memref<64x32xbf16, #tpu.memory_space<vmem>>, %arg3: memref<32x128xbf16, #tpu.memory_space<vmem>>, %arg4: memref<64x128xbf16, #tpu.memory_space<vmem>>, %arg5: memref<1x2x128xf32, #tpu.memory_space<vmem>>) attributes {dimension_semantics = [#tpu.dimension_semantics<parallel>, #tpu.dimension_semantics<parallel>], iteration_bounds = array<i64: 2, 1>, scalar_prefetch = 0 : i64, scratch_operands = 0 : i64, tpu.core_type = #tpu.core_type<tc>, window_params = [{transform_indices = @transform_0, window_bounds = array<i64: 64, 32>}, {transform_indices = @transform_1, window_bounds = array<i64: 32, 128>}, {transform_indices = @transform_2, window_bounds = array<i64: 64, 128>}, {transform_indices = @transform_3, window_bounds = array<i64: 1, 2, 128>}]} {
    %c0 = arith.constant 0 : index
    %c0_0 = arith.constant 0 : index
    %0 = vector.load %arg2[%c0, %c0_0] : memref<64x32xbf16, #tpu.memory_space<vmem>>, vector<64x32xbf16>
    %c0_1 = arith.constant 0 : index
    %c0_2 = arith.constant 0 : index
    %1 = vector.load %arg3[%c0_1, %c0_2] : memref<32x128xbf16, #tpu.memory_space<vmem>>, vector<32x128xbf16>
    %cst = arith.constant dense<0.000000e+00> : vector<64x128xf32>
    %2 = tpu.matmul %0, %1, %cst {dimension_numbers = #tpu.dot_dimension_numbers<[1], [0], [0], [1], [0, 0, 1, 1], [], []>} : vector<64x32xbf16>, vector<32x128xbf16>, vector<64x128xf32> -> vector<64x128xf32>
    %3 = arith.truncf %2 : vector<64x128xf32> to vector<64x128xbf16>
    %c0_3 = arith.constant 0 : index
    %c0_4 = arith.constant 0 : index
    %4 = vector.load %arg4[%c0_3, %c0_4] : memref<64x128xbf16, #tpu.memory_space<vmem>>, vector<64x128xbf16>
    tpu.vector_store %arg4[%c0_3, %c0_4], %3 {strides = array<i32>} : memref<64x128xbf16, #tpu.memory_space<vmem>>, vector<64x128xbf16>,
    %cst_5 = arith.constant dense<0.000000e+00> : vector<128xf32>
    %5 = vector.multi_reduction <add>, %2, %cst_5 [0] : vector<64x128xf32> to vector<128xf32>
    %6 = vector.shape_cast %5 : vector<128xf32> to vector<1x128xf32>
    %c0_6 = arith.constant 0 : index
    %c0_7 = arith.constant 0 : index
    %c0_8 = arith.constant 0 : index
    %7 = vector.load %arg5[%c0_6, %c0_7, %c0_8] : memref<1x2x128xf32, #tpu.memory_space<vmem>>, vector<1x1x128xf32>
    %8 = vector.shape_cast %7 : vector<1x1x128xf32> to vector<1x128xf32>
    %9 = vector.shape_cast %6 : vector<1x128xf32> to vector<1x1x128xf32>
    tpu.vector_store %arg5[%c0_6, %c0_7, %c0_8], %9 {strides = array<i32>} : memref<1x2x128xf32, #tpu.memory_space<vmem>>, vector<1x1x128xf32>,
    %10 = arith.mulf %2, %2 : vector<64x128xf32>
    %cst_9 = arith.constant dense<0.000000e+00> : vector<128xf32>
    %11 = vector.multi_reduction <add>, %10, %cst_9 [0] : vector<64x128xf32> to vector<128xf32>
    %12 = vector.shape_cast %11 : vector<128xf32> to vector<1x128xf32>
    %c0_10 = arith.constant 0 : index
    %c1 = arith.constant 1 : index
    %c0_11 = arith.constant 0 : index
    %13 = vector.load %arg5[%c0_10, %c1, %c0_11] : memref<1x2x128xf32, #tpu.memory_space<vmem>>, vector<1x1x128xf32>
    %14 = vector.shape_cast %13 : vector<1x1x128xf32> to vector<1x128xf32>
    %15 = vector.shape_cast %12 : vector<1x128xf32> to vector<1x1x128xf32>
    tpu.vector_store %arg5[%c0_10, %c1, %c0_11], %15 {strides = array<i32>} : memref<1x2x128xf32, #tpu.memory_space<vmem>>, vector<1x1x128xf32>,
    return
  }
  func.func @transform_0(%arg0: i32, %arg1: i32) -> (i32, i32) {
    %c0_i32 = arith.constant 0 : i32
    %c0_i32_0 = arith.constant 0 : i32
    return %arg0, %c0_i32 : i32, i32
  }
  func.func @transform_1(%arg0: i32, %arg1: i32) -> (i32, i32) {
    %c0_i32 = arith.constant 0 : i32
    %c0_i32_0 = arith.constant 0 : i32
    return %c0_i32, %arg1 : i32, i32
  }
  func.func @transform_2(%arg0: i32, %arg1: i32) -> (i32, i32) {
    %c0_i32 = arith.constant 0 : i32
    return %arg0, %arg1 : i32, i32
  }
  func.func @transform_3(%arg0: i32, %arg1: i32) -> (i32, i32, i32) {
    %c0_i32 = arith.constant 0 : i32
    %c0_i32_0 = arith.constant 0 : i32
    return %arg0, %c0_i32, %arg1 : i32, i32, i32
  }
}

</mosaic_0001>

<llo_original>
// kernel: squeeze.34
$region0: #{squeeze.34}
  %s0 = inlined_call_operand.vmem [shape: f32[2,32], index: 0, kind: input, shape index: {}]
  %s1 = inlined_call_operand.vmem [shape: f32[2,8,4], index: 1, kind: output, shape index: {}]
  $region1: #{squeeze.34} parent=0
    #allocation0 [shape = 'u8[4096]{0}', space=vmem, size = 0x1000, scoped, tag = 'scoped mem for input reshape']
    %s3 = sshllo.u32 0, 2
    %v4 = vld [vmem:[%s0] sm:%s3]
    %5 = vst [vmem:[#allocation0] sm:%s3] %v4
    %v6 = vld [vmem:[#allocation0] sm:$0x3]
    %vm7 = vcmask 31744
    %8 = vst.msk [vmem:[%s1] ss:$8 sm:$0x3] %vm7, %v6
    %v9 = vld [vmem:[#allocation0] sm:$0x3]
    %10 = vrot.lane.b32.xlu0 %v9, 124
    %v11 = vpop.permute.xlu0 %10
    %vm12 = vcmask 31744
    %s13 = scalar_lea.vmem %s1, 1
    %14 = vst.msk [vmem:[%s13] ss:$8 sm:$0x3] %vm12, %v11
    %v15 = vld [vmem:[#allocation0] sm:$0x3]
    %16 = vrot.lane.b32.xlu0 %v15, 120
    %v17 = vpop.permute.xlu0 %16
    %vm18 = vcmask 31744
    %s19 = scalar_lea.vmem %s1, 2
    %20 = vst.msk [vmem:[%s19] ss:$8 sm:$0x3] %vm18, %v17
    %v21 = vld [vmem:[#allocation0] sm:$0x3]
    %22 = vrot.lane.b32.xlu0 %v21, 116
    %v23 = vpop.permute.xlu0 %22
    %vm24 = vcmask 31744
    %s25 = scalar_lea.vmem %s1, 3
    %26 = vst.msk [vmem:[%s25] ss:$8 sm:$0x3] %vm24, %v23
    %v27 = vld [vmem:[#allocation0] sm:$0x3]
    %28 = vrot.lane.b32.xlu0 %v27, 112
    %v29 = vpop.permute.xlu0 %28
    %vm30 = vcmask 31744
    %s31 = scalar_lea.vmem %s1, 4
    %32 = vst.msk [vmem:[%s31] ss:$8 sm:$0x3] %vm30, %v29
    %v33 = vld [vmem:[#allocation0] sm:$0x3]
    %34 = vrot.lane.b32.xlu0 %v33, 108
    %v35 = vpop.permute.xlu0 %34
    %vm36 = vcmask 31744
    %s37 = scalar_lea.vmem %s1, 5
    %38 = vst.msk [vmem:[%s37] ss:$8 sm:$0x3] %vm36, %v35
    %v39 = vld [vmem:[#allocation0] sm:$0x3]
    %40 = vrot.lane.b32.xlu0 %v39, 104
    %v41 = vpop.permute.xlu0 %40
    %vm42 = vcmask 31744
    %s43 = scalar_lea.vmem %s1, 6
    %44 = vst.msk [vmem:[%s43] ss:$8 sm:$0x3] %vm42, %v41
    %v45 = vld [vmem:[#allocation0] sm:$0x3]
    %46 = vrot.lane.b32.xlu0 %v45, 100
    %v47 = vpop.permute.xlu0 %46
    %vm48 = vcmask 31744
    %s49 = scalar_lea.vmem %s1, 7
    %50 = vst.msk [vmem:[%s49] ss:$8 sm:$0x3] %vm48, %v47

// kernel: g_block_forward.1
$region0: #{g_block_forward.1}
  #allocation0 [shape = 'u32[]', space=smem, size = 0x4, offset = 0x4, fixed_abs, tag = 'smem constant byte address 0x4 - core index']
  #allocation1 [shape = 'u32[144,128]{1,0:T(1,128)}', space=vmem, size = 0x12000, scoped, tag = 'internal scratch']
  %s0 = inlined_call_operand.hbm [shape: bf16[128,32], index: 0, kind: input, shape index: {}]
  %s1 = inlined_call_operand.hbm [shape: bf16[32,128], index: 1, kind: input, shape index: {}]
  %s2 = inlined_call_operand.hbm [shape: bf16[128,128], index: 2, kind: output, shape index: {0}]
  %s3 = inlined_call_operand.hbm [shape: f32[2,2,128], index: 3, kind: output, shape index: {1}]
  %4 = xla_tuple %s2, %s3
  %s5 = sld [smem:[#allocation0]]
  $region57: #{g_block_forward.1} parent=0
    _
  %s7 = ssub.s32 1, %s5
  %s8 = scalar_select 0, %s7, %s5
  $region1: #{g_block_forward.1} parent=0
    #allocation2 [shape = 'u8[32768]{0}', space=vmem, size = 0x8000, scoped, tag = 'input window, operand 0']
    #allocation3 [shape = 's32[2]{0}', space=sflag, size = 0x8, scoped, tag = 'scoped memory for g_block_forward.1']
    #allocation4 [shape = 's32[2]{0}', space=sflag, size = 0x8, scoped, tag = 'scoped memory for g_block_forward.1']
    #allocation5 [shape = 'u8[8192]{0}', space=vmem, size = 0x2000, scoped, tag = 'input window, operand 1, single buffered']
    #allocation6 [shape = 's32[1]{0}', space=sflag, size = 0x4, scoped, tag = 'scoped memory for g_block_forward.1']
    #allocation7 [shape = 'u8[32768]{0}', space=vmem, size = 0x8000, scoped, tag = 'output window, operand 0']
    #allocation8 [shape = 'u8[2048]{0}', space=vmem, size = 0x800, scoped, tag = 'output window, operand 1']
    #allocation9 [shape = 's32[2]{0}', space=sflag, size = 0x8, scoped, tag = 'scoped memory for g_block_forward.1']
    %9 = vsyncpa [#allocation3], 0
    %s10 = scalar_lea.sflag [#allocation3], 1
    %11 = vsyncpa %s10, 0
    %12 = vsyncpa [#allocation6], 0
    %13 = vsyncpa [#allocation4], 0
    %s14 = scalar_lea.sflag [#allocation4], 1
    %15 = vsyncpa %s14, 0
    %16 = vsyncpa [#allocation9], 0
    %s17 = scalar_lea.sflag [#allocation9], 1
    %18 = vsyncpa %s17, 0
    loop: start=0, step=1, limit=4
    $region2: #{g_block_forward.1} parent=1 // loop_pre_header
      _
    $region3: #{g_block_forward.1} parent=1 // loop_header
      %s20 = sphi 0, %s24
      %p21 = scmp.ge.s32.totalorder %s20, 4
      %s27 = sphi 0, %s39
      %s28 = sphi 0, %s35
      %s29 = sphi 0, %s27
      %s30 = sphi 0, %s28
      %s31 = sphi 0, %s29
      %s32 = sphi 0, %s30
      %s42 = sphi 0, %s44
      %s45 = sphi 0, %s42
      %s46 = sphi 0, %s45
      %s62 = sphi 0, %s46
      %s68 = sphi 0, %s70
      %s71 = sphi 0, %s68
      %s72 = sphi 0, %s71
      %s88 = sphi 0, %s72
      %s96 = sphi 0, %s98
      %s99 = sphi 0, %s96
      %s100 = sphi 0, %s99
      %s116 = sphi 0, %s100
      %s124 = sphi 0, %s126
      %s127 = sphi 0, %s124
      %s128 = sphi 0, %s127
      %s144 = sphi 0, %s128
    $region4: #{g_block_forward.1} parent=1 // loop_header_branch
      %23 = sbr.rel (%p21) target = $region8
    $region5: #{g_block_forward.1} parent=1 // loop_body
      %s25 = ssub.s32 %s20, 1
      %s26 = ssub.s32 %s20, 2
      %s33 = sadd.s32 1, %s28
      %p34 = scmp.ge.s32.totalorder %s33, 1
      %s35 = scalar_select %p34, 0, %s33
      %s36 = sadd.s32 1, %s27
      %s37 = scalar_select %p34, %s36, %s27
      %p38 = scmp.ge.s32.totalorder %s37, 2
      %s39 = scalar_select %p38, 0, %s37
      %s40 = ssub.s32 %s27, %s39
      %p41 = scmp.eq.s32.totalorder %s40, 0
      %s43 = sadd.s32 %s42, 1
      %s44 = scalar_select %p41, %s42, %s43
      %p47 = pneg %p41
      %p48 = scmp.eq.s32.totalorder %s20, 1
      %p49 = por %p47, %p48
      %p50 = scmp.ne.s32.totalorder %s42, %s45
      %p51 = scmp.eq.s32.totalorder %s20, 0
      %p52 = por %p50, %p51
      %p53 = scmp.ne.s32.totalorder %s42, %s45
      %p54 = scmp.eq.s32.totalorder %s25, 1
      %p55 = por %p53, %p54
      %p56 = scmp.ne.s32.totalorder %s45, %s46
      %p57 = scmp.eq.s32.totalorder %s25, 0
      %p58 = por %p56, %p57
      %p59 = scmp.ne.s32.totalorder %s45, %s46
      %p60 = scmp.eq.s32.totalorder %s26, 1
      %p61 = por %p59, %p60
      %p63 = scmp.ne.s32.totalorder %s46, %s62
      %p64 = scmp.eq.s32.totalorder %s26, 0
      %p65 = por %p63, %p64
      %s66 = ssub.s32 %s28, %s35
      %p67 = scmp.eq.s32.totalorder %s66, 0
      %s69 = sadd.s32 %s68, 1
      %s70 = scalar_select %p67, %s68, %s69
      %p73 = pneg %p67
      %p74 = scmp.eq.s32.totalorder %s20, 1
      %p75 = por %p73, %p74
      %p76 = scmp.ne.s32.totalorder %s68, %s71
      %p77 = scmp.eq.s32.totalorder %s20, 0
      %p78 = por %p76, %p77
      %p79 = scmp.ne.s32.totalorder %s68, %s71
      %p80 = scmp.eq.s32.totalorder %s25, 1
      %p81 = por %p79, %p80
      %p82 = scmp.ne.s32.totalorder %s71, %s72
      %p83 = scmp.eq.s32.totalorder %s25, 0
      %p84 = por %p82, %p83
      %p85 = scmp.ne.s32.totalorder %s71, %s72
      %p86 = scmp.eq.s32.totalorder %s26, 1
      %p87 = por %p85, %p86
      %p89 = scmp.ne.s32.totalorder %s72, %s88
      %p90 = scmp.eq.s32.totalorder %s26, 0
      %p91 = por %p89, %p90
      %s92 = ssub.s32 %s27, %s39
      %s93 = ssub.s32 %s28, %s35
      %s94 = sor.u32 %s92, %s93
      %p95 = scmp.eq.s32.totalorder %s94, 0
      %s97 = sadd.s32 %s96, 1
      %s98 = scalar_select %p95, %s96, %s97
      %p101 = pneg %p95
      %p102 = scmp.eq.s32.totalorder %s20, 1
      %p103 = por %p101, %p102
      %p104 = scmp.ne.s32.totalorder %s96, %s99
      %p105 = scmp.eq.s32.totalorder %s20, 0
      %p106 = por %p104, %p105
      %p107 = scmp.ne.s32.totalorder %s96, %s99
      %p108 = scmp.eq.s32.totalorder %s25, 1
      %p109 = por %p107, %p108
      %p110 = scmp.ne.s32.totalorder %s99, %s100
      %p111 = scmp.eq.s32.totalorder %s25, 0
      %p112 = por %p110, %p111
      %p113 = scmp.ne.s32.totalorder %s99, %s100
      %p114 = scmp.eq.s32.totalorder %s26, 1
      %p115 = por %p113, %p114
      %p117 = scmp.ne.s32.totalorder %s100, %s116
      %p118 = scmp.eq.s32.totalorder %s26, 0
      %p119 = por %p117, %p118
      %s120 = ssub.s32 %s27, %s39
      %s121 = ssub.s32 %s28, %s35
      %s122 = sor.u32 %s120, %s121
      %p123 = scmp.eq.s32.totalorder %s122, 0
      %s125 = sadd.s32 %s124, 1
      %s126 = scalar_select %p123, %s124, %s125
      %p129 = pneg %p123
      %p130 = scmp.eq.s32.totalorder %s20, 1
      %p131 = por %p129, %p130
      %p132 = scmp.ne.s32.totalorder %s124, %s127
      %p133 = scmp.eq.s32.totalorder %s20, 0
      %p134 = por %p132, %p133
      %p135 = scmp.ne.s32.totalorder %s124, %s127
      %p136 = scmp.eq.s32.totalorder %s25, 1
      %p137 = por %p135, %p136
      %p138 = scmp.ne.s32.totalorder %s127, %s128
      %p139 = scmp.eq.s32.totalorder %s25, 0
      %p140 = por %p138, %p139
      %p141 = scmp.ne.s32.totalorder %s127, %s128
      %p142 = scmp.eq.s32.totalorder %s26, 1
      %p143 = por %p141, %p142
      %p145 = scmp.ne.s32.totalorder %s128, %s144
      %p146 = scmp.eq.s32.totalorder %s26, 0
      %p147 = por %p145, %p146
      %p148 = scmp.le.s32.totalorder 1, %s20
      %p149 = scmp.lt.s32.totalorder %s20, 3
      %p150 = pnand %p148, %p149
      %p151 = pneg %p150
      // Predicated region
      $region9: #{g_block_forward.1} parent=5 // pred_check
        _
      $region10: #{g_block_forward.1} parent=5 // pred_check_branch
        %153 = sbr.rel (%p150) target = $region12
      $region11: #{g_block_forward.1} parent=5 // pred_region
        %s154 = ssub.s32 %s20, 1
        // Predicated region
        $region13: #{g_block_forward.1} parent=11 // pred_check
          %p155 = pneg %p84
        $region14: #{g_block_forward.1} parent=11 // pred_check_branch
          %157 = sbr.rel (%p155) target = $region16
        $region15: #{g_block_forward.1} parent=11 // pred_region
          %s159 = ssub.s32 256, 256
          %160 = vsyncadd [#allocation6], %s159
          %s161 = smul.addr %s30, 64
          %s162 = scalar_lea.hbm %s1, %s161
          %s163 = sshll.u32 [#allocation5], 4
          %s164 = int_to_ptr.vmem [resolvable:$true] %s163
          %169 = dma.hbm_to_vmem [thread:$0]  %s162, 256, %s164, [#allocation6], 64, 64, 4
        $region16: #{g_block_forward.1} parent=11 // pred_fallthru
          _
      $region12: #{g_block_forward.1} parent=5 // pred_fallthru
        _
      %p170 = scmp.lt.s32.totalorder %s20, 2
      // Predicated region
      $region17: #{g_block_forward.1} parent=5 // pred_check
        %p171 = pneg %p170
      $region18: #{g_block_forward.1} parent=5 // pred_check_branch
        %173 = sbr.rel (%p171) target = $region20
      $region19: #{g_block_forward.1} parent=5 // pred_region
        // Predicated region
        $region21: #{g_block_forward.1} parent=19 // pred_check
          %p174 = pneg %p52
        $region22: #{g_block_forward.1} parent=19 // pred_check_branch
          %176 = sbr.rel (%p174) target = $region24
        $region23: #{g_block_forward.1} parent=19 // pred_region
          %s177 = sand.u32 %s42, 1
          %s178 = scalar_lea.sflag [#allocation3], %s177
          %s179 = sand.u32 %s42, 1
          %s180 = smul.addr %s179, 32
          %s181 = scalar_lea.vmem [#allocation2], %s180
          %s182 = smul.u32 8, %s27
          %s184 = ssub.s32 512, 512
          %185 = vsyncadd %s178, %s184
          %s186 = smul.addr %s182, 64
          %s187 = scalar_lea.hbm %s0, %s186
          %s188 = sshll.u32 %s181, 4
          %s189 = int_to_ptr.vmem [resolvable:$true] %s188
          %194 = dma.hbm_to_vmem [thread:$0]  %s187, 512, %s189, %s178, 64, 64, 4
        $region24: #{g_block_forward.1} parent=19 // pred_fallthru
          _
      $region20: #{g_block_forward.1} parent=5 // pred_fallthru
        _
      %p195 = scmp.le.s32.totalorder 1, %s20
      %p196 = scmp.lt.s32.totalorder %s20, 3
      %p197 = pnand %p195, %p196
      %p198 = pneg %p197
      // Predicated region
      $region25: #{g_block_forward.1} parent=5 // pred_check
        _
      $region26: #{g_block_forward.1} parent=5 // pred_check_branch
        %200 = sbr.rel (%p197) target = $region28
      $region27: #{g_block_forward.1} parent=5 // pred_region
        %s201 = ssub.s32 %s20, 1
        %s202 = sand.u32 %s45, 1
        %s203 = scalar_lea.sflag [#allocation3], %s202
        %s204 = sand.u32 %s45, 1
        %s205 = smul.addr %s204, 32
        %s206 = scalar_lea.vmem [#allocation2], %s205
        // Predicated region
        $region29: #{g_block_forward.1} parent=27 // pred_check
          %p207 = pneg %p58
        $region30: #{g_block_forward.1} parent=27 // pred_check_branch
          %209 = sbr.rel (%p207) target = $region32
        $region31: #{g_block_forward.1} parent=27 // pred_region
          %210 = dma.done %s203, 512
        $region32: #{g_block_forward.1} parent=27 // pred_fallthru
          _
        // Predicated region
        $region33: #{g_block_forward.1} parent=27 // pred_check
          %p211 = pneg %p84
        $region34: #{g_block_forward.1} parent=27 // pred_check_branch
          %213 = sbr.rel (%p211) target = $region36
        $region35: #{g_block_forward.1} parent=27 // pred_region
          %214 = dma.done [#allocation6], 256
        $region36: #{g_block_forward.1} parent=27 // pred_fallthru
          _
        %s215 = sand.u32 %s45, 1
        %s216 = scalar_lea.sflag [#allocation3], %s215
        %s217 = sand.u32 %s45, 1
        %s218 = smul.addr %s217, 32
        %s219 = scalar_lea.vmem [#allocation2], %s218
        %p220 = pneg %p58
        %p221 = pneg %p55
        %p222 = pneg %p84
        %p223 = pneg %p81
        %p224 = pneg %p112
        %p225 = pneg %p109
        %s226 = sand.u32 %s99, 1
        %s227 = scalar_lea.sflag [#allocation4], %s226
        %s228 = sand.u32 %s99, 1
        %s229 = smul.addr %s228, 32
        %s230 = scalar_lea.vmem [#allocation7], %s229
        %p231 = pneg %p140
        %p232 = pneg %p137
        %s233 = sand.u32 %s127, 1
        %s234 = scalar_lea.sflag [#allocation9], %s233
        %s235 = sand.u32 %s127, 1
        %s236 = smul.addr %s235, 2
        %s237 = scalar_lea.vmem [#allocation8], %s236
        %s238 = smul.u32 8, %s29
        %s239 = smul.u32 8, %s29
        %v241 = vld [vmem:[%s206] sm:$0xf]
        %v242 = vld [vmem:[%s206 + $0x4] sm:$0xf]
        %v243 = vld [vmem:[%s206 + $0x8] sm:$0xf]
        %v244 = vld [vmem:[%s206 + $0xc] sm:$0xf]
        %v245 = vld [vmem:[%s206 + $0x10] sm:$0xf]
        %v246 = vld [vmem:[%s206 + $0x14] sm:$0xf]
        %v247 = vld [vmem:[%s206 + $0x18] sm:$0xf]
        %v248 = vld [vmem:[%s206 + $0x1c] sm:$0xf]
        %v249 = vld [vmem:[#allocation5] sm:$0xf]
        %v250 = vld [vmem:[#allocation5 + $0x4] sm:$0xf]
        %v251 = vld [vmem:[#allocation5 + $0x8] sm:$0xf]
        %v252 = vld [vmem:[#allocation5 + $0xc] sm:$0xf]
        %v261 = vunpack.c.l.b16 %v241
        %v262 = vunpack.c.l.b16 %v242
        %v263 = vunpack.c.l.b16 %v243
        %v264 = vunpack.c.l.b16 %v244
        %v265 = vunpack.c.l.b16 %v245
        %v266 = vunpack.c.l.b16 %v246
        %v267 = vunpack.c.l.b16 %v247
        %v268 = vunpack.c.l.b16 %v248
        %v269 = vpack.c.b16 %v262, %v261
        %v270 = vpack.c.b16 %v264, %v263
        %v271 = vpack.c.b16 %v266, %v265
        %v272 = vpack.c.b16 %v268, %v267
        %v277 = vunpack.c.l.b16 %v249
        %v278 = vunpack.c.l.b16 %v250
        %v279 = vunpack.c.l.b16 %v251
        %v280 = vunpack.c.l.b16 %v252
        %v281 = vpack.c.b16 %v278, %v277
        %v282 = vpack.c.b16 %v280, %v279
        %vm285 = vcmask 261120
        %v287 = vsel %vm285, %v269, 0
        %v290 = vsel %vm285, %v270, 0
        %v293 = vsel %vm285, %v271, 0
        %v296 = vsel %vm285, %v272, 0
        %298 = vmatprep.subr.bf16.mxu0 0
        %299 = vmatpush1.bf16.msra.mxu0 %v281
        %300 = vmatprep.subr.bf16.mxu0 0
        %301 = vmatpush1.bf16.msra.mxu0 %v282
        %302 = vmatprep.subr.bf16.mxu0 0
        %303 = vmatpush1.bf16.msra.mxu0 0
        %304 = vmatprep.subr.bf16.mxu0 0
        %305 = vmatpush1.bf16.msra.mxu0 0
        %306 = vmatprep.subr.bf16.mxu0 0
        %307 = vmatpush1.bf16.msra.mxu0 0
        %308 = vmatprep.subr.bf16.mxu0 0
        %309 = vmatpush1.bf16.msra.mxu0 0
        %310 = vmatprep.subr.bf16.mxu0 0
        %311 = vmatpush1.bf16.msra.mxu0 0
        %312 = vmatprep.subr.bf16.mxu0 0
        %313 = vmatpush1.bf16.msra.mxu0 0
        %314 = vmatprep.subr.bf16.mxu0 0
        %315 = vmatpush1.bf16.msra.mxu0 0
        %316 = vmatprep.subr.bf16.mxu0 0
        %317 = vmatpush1.bf16.msra.mxu0 0
        %318 = vmatprep.subr.bf16.mxu0 0
        %319 = vmatpush1.bf16.msra.mxu0 0
        %320 = vmatprep.subr.bf16.mxu0 0
        %321 = vmatpush1.bf16.msra.mxu0 0
        %322 = vmatprep.subr.bf16.mxu0 0
        %323 = vmatpush1.bf16.msra.mxu0 0
        %324 = vmatprep.subr.bf16.mxu0 0
        %325 = vmatpush1.bf16.msra.mxu0 0
        %326 = vmatprep.subr.bf16.mxu0 0
        %327 = vmatpush1.bf16.msra.mxu0 0
        %328 = vmatprep.subr.bf16.mxu0 0
        %329 = vmatpush1.bf16.msra.mxu0 0
        %330 = vmatprep.mubr.bf16.mxu0 0
        %331 = vmatmul.mubr.bf16.gmra.mrb[0].mxu0 %v287
        %v332 = vpop.f32.mrb[0].mxu0
        %v333 = vadd.f32 0.0, %v332
        %v334 = vpop.f32.mrb[0].mxu0
        %v335 = vpop.f32.mrb[0].mxu0
        %v336 = vadd.f32 0.0, %v335
        %v337 = vpop.f32.mrb[0].mxu0
        %338 = vmatprep.mubr.bf16.mxu0 0
        %339 = vmatmul.mubr.bf16.gmra.mrb[0].mxu0 %v290
        %v340 = vpop.f32.mrb[0].mxu0
        %v341 = vadd.f32 0.0, %v340
        %v342 = vpop.f32.mrb[0].mxu0
        %v343 = vpop.f32.mrb[0].mxu0
        %v344 = vadd.f32 0.0, %v343
        %v345 = vpop.f32.mrb[0].mxu0
        %346 = vmatprep.mubr.bf16.mxu0 0
        %347 = vmatmul.mubr.bf16.gmra.mrb[0].mxu0 %v293
        %v348 = vpop.f32.mrb[0].mxu0
        %v349 = vadd.f32 0.0, %v348
        %v350 = vpop.f32.mrb[0].mxu0
        %v351 = vpop.f32.mrb[0].mxu0
        %v352 = vadd.f32 0.0, %v351
        %v353 = vpop.f32.mrb[0].mxu0
        %354 = vmatprep.mubr.bf16.mxu0 0
        %355 = vmatmul.mubr.bf16.gmra.mrb[0].mxu0 %v296
        %v356 = vpop.f32.mrb[0].mxu0
        %v357 = vadd.f32 0.0, %v356
        %v358 = vpop.f32.mrb[0].mxu0
        %v359 = vpop.f32.mrb[0].mxu0
        %v360 = vadd.f32 0.0, %v359
        %v361 = vpop.f32.mrb[0].mxu0
        %362 = vdwg.mxu0
        %v363 = vpack.c.bf16 %v336, %v333
        %v364 = vpack.c.bf16 %v344, %v341
        %v365 = vpack.c.bf16 %v352, %v349
        %v366 = vpack.c.bf16 %v360, %v357
        %v371 = vunpack.c.l.b16 %v363
        %v372 = vunpack.c.h.b16 %v363
        %v373 = vunpack.c.l.b16 %v364
        %v374 = vunpack.c.h.b16 %v364
        %v375 = vunpack.c.l.b16 %v365
        %v376 = vunpack.c.h.b16 %v365
        %v377 = vunpack.c.l.b16 %v366
        %v378 = vunpack.c.h.b16 %v366
        %v379 = vpack.c.b16 %v371, %v371
        %v380 = vpack.c.b16 %v372, %v372
        %v381 = vpack.c.b16 %v373, %v373
        %v382 = vpack.c.b16 %v374, %v374
        %v383 = vpack.c.b16 %v375, %v375
        %v384 = vpack.c.b16 %v376, %v376
        %v385 = vpack.c.b16 %v377, %v377
        %v386 = vpack.c.b16 %v378, %v378
        %395 = vst [vmem:[%s230] sm:$0xf] %v379
        %396 = vst [vmem:[%s230 + $0x4] sm:$0xf] %v380
        %397 = vst [vmem:[%s230 + $0x8] sm:$0xf] %v381
        %398 = vst [vmem:[%s230 + $0xc] sm:$0xf] %v382
        %399 = vst [vmem:[%s230 + $0x10] sm:$0xf] %v383
        %400 = vst [vmem:[%s230 + $0x14] sm:$0xf] %v384
        %401 = vst [vmem:[%s230 + $0x18] sm:$0xf] %v385
        %402 = vst [vmem:[%s230 + $0x1c] sm:$0xf] %v386
        %v403 = vadd.f32 %v333, %v336
        %v404 = vadd.f32 %v403, %v341
        %v405 = vadd.f32 %v404, %v344
        %v406 = vadd.f32 %v405, %v349
        %v407 = vadd.f32 %v406, %v352
        %v408 = vadd.f32 %v407, %v357
        %v409 = vadd.f32 %v408, %v360
        %v410 = vrot.slane %v409, 4
        %v411 = vadd.f32 %v409, %v410
        %v412 = vrot.slane %v411, 2
        %v413 = vadd.f32 %v411, %v412
        %v414 = vrot.slane %v413, 1
        %v415 = vadd.f32 %v413, %v414
        %416 = vst [vmem:[%s237] sm:$0x1] %v415
        %v417 = vmul.f32 %v333, %v333
        %v418 = vmul.f32 %v336, %v336
        %v419 = vmul.f32 %v341, %v341
        %v420 = vmul.f32 %v344, %v344
        %v421 = vmul.f32 %v349, %v349
        %v422 = vmul.f32 %v352, %v352
        %v423 = vmul.f32 %v357, %v357
        %v424 = vmul.f32 %v360, %v360
        %v425 = vadd.f32 %v417, %v418
        %v426 = vadd.f32 %v425, %v419
        %v427 = vadd.f32 %v426, %v420
        %v428 = vadd.f32 %v427, %v421
        %v429 = vadd.f32 %v428, %v422
        %v430 = vadd.f32 %v429, %v423
        %v431 = vadd.f32 %v430, %v424
        %v432 = vrot.slane %v431, 4
        %v433 = vadd.f32 %v431, %v432
        %v434 = vrot.slane %v433, 2
        %v435 = vadd.f32 %v433, %v434
        %v436 = vrot.slane %v435, 1
        %v437 = vadd.f32 %v435, %v436
        %438 = vst [vmem:[%s237 + $0x1] sm:$0x1] %v437
        %s439 = sand.u32 %s99, 1
        %s440 = scalar_lea.sflag [#allocation4], %s439
        %s441 = sand.u32 %s99, 1
        %s442 = smul.addr %s441, 32
        %s443 = scalar_lea.vmem [#allocation7], %s442
        %s444 = sand.u32 %s127, 1
        %s445 = scalar_lea.sflag [#allocation9], %s444
        %s446 = sand.u32 %s127, 1
        %s447 = smul.addr %s446, 2
        %s448 = scalar_lea.vmem [#allocation8], %s447
        // Predicated region
        $region37: #{g_block_forward.1} parent=27 // pred_check
          %p449 = pneg %p109
        $region38: #{g_block_forward.1} parent=27 // pred_check_branch
          %451 = sbr.rel (%p449) target = $region40
        $region39: #{g_block_forward.1} parent=27 // pred_region
          %s452 = smul.u32 8, %s29
          %s454 = ssub.s32 512, 512
          %455 = vsyncadd %s440, %s454
          %s456 = sadd.s32 %s30, %s452
          %s457 = smul.addr %s456, 64
          %s458 = scalar_lea.hbm %s2, %s457
          %s459 = sshll.u32 %s443, 4
          %s460 = int_to_ptr.vmem [resolvable:$true] %s459
          %465 = dma.vmem_to_hbm [thread:$0]  %s460, 512, %s458, %s440, 64, 64, 4
        $region40: #{g_block_forward.1} parent=27 // pred_fallthru
          _
        // Predicated region
        $region41: #{g_block_forward.1} parent=27 // pred_check
          %p466 = pneg %p137
        $region42: #{g_block_forward.1} parent=27 // pred_check_branch
          %468 = sbr.rel (%p466) target = $region44
        $region43: #{g_block_forward.1} parent=27 // pred_region
          %s470 = ssub.s32 32, 32
          %471 = vsyncadd %s445, %s470
          %s472 = sadd.s32 %s30, %s29
          %s473 = smul.addr %s472, 32
          %s474 = scalar_lea.hbm %s3, %s473
          %s476 = sshll.u32 %s448, 4
          %s477 = int_to_ptr.vmem [resolvable:$true] %s476
          %479 = dma.vmem_to_hbm [thread:$0]  %s477, 32, %s474, %s445
        $region44: #{g_block_forward.1} parent=27 // pred_fallthru
          _
      $region28: #{g_block_forward.1} parent=5 // pred_fallthru
        _
      %p480 = scmp.le.s32.totalorder 2, %s20
      // Predicated region
      $region45: #{g_block_forward.1} parent=5 // pred_check
        %p481 = pneg %p480
      $region46: #{g_block_forward.1} parent=5 // pred_check_branch
        %483 = sbr.rel (%p481) target = $region48
      $region47: #{g_block_forward.1} parent=5 // pred_region
        %s484 = ssub.s32 %s20, 2
        // Predicated region
        $region49: #{g_block_forward.1} parent=47 // pred_check
          %p485 = pneg %p115
        $region50: #{g_block_forward.1} parent=47 // pred_check_branch
          %487 = sbr.rel (%p485) target = $region52
        $region51: #{g_block_forward.1} parent=47 // pred_region
          %s488 = sand.u32 %s100, 1
          %s489 = scalar_lea.sflag [#allocation4], %s488
          %s490 = sand.u32 %s100, 1
          %s491 = smul.addr %s490, 32
          %s492 = scalar_lea.vmem [#allocation7], %s491
          %493 = dma.done %s489, 512
        $region52: #{g_block_forward.1} parent=47 // pred_fallthru
          _
        // Predicated region
        $region53: #{g_block_forward.1} parent=47 // pred_check
          %p494 = pneg %p143
        $region54: #{g_block_forward.1} parent=47 // pred_check_branch
          %496 = sbr.rel (%p494) target = $region56
        $region55: #{g_block_forward.1} parent=47 // pred_region
          %s497 = sand.u32 %s128, 1
          %s498 = scalar_lea.sflag [#allocation9], %s497
          %s499 = sand.u32 %s128, 1
          %s500 = smul.addr %s499, 2
          %s501 = scalar_lea.vmem [#allocation8], %s500
          %502 = dma.done %s498, 32
        $region56: #{g_block_forward.1} parent=47 // pred_fallthru
          _
      $region48: #{g_block_forward.1} parent=5 // pred_fallthru
        _
    $region6: #{g_block_forward.1} parent=1 // loop_footer
      %s24 = sadd.s32 1, %s20
    $region7: #{g_block_forward.1} parent=1 // loop_footer_branch
      %19 = sbr.rel target = $region3
    $region8: #{g_block_forward.1} parent=1 // loop_exit
      _
    %503 = vsyncpa [#allocation3], 1
    %s504 = scalar_lea.sflag [#allocation3], 1
    %505 = vsyncpa %s504, 1
    %506 = vsyncpa [#allocation6], 1
    %507 = vsyncpa [#allocation4], 1
    %s508 = scalar_lea.sflag [#allocation4], 1
    %509 = vsyncpa %s508, 1
    %510 = vsyncpa [#allocation9], 1
    %s511 = scalar_lea.sflag [#allocation9], 1
    %512 = vsyncpa %s511, 1

</llo_original>
